<compile_context>
chip_gen: v7x
topology: tpu7x:2x2x1
jax: 0.10.0
libtpu: 0.0.40
codegen_flags: <defaults>
</compile_context>

<pallas_src>
import jax
import jax.numpy as jnp
from jax.experimental import pallas as pl
from jax.experimental.pallas import tpu as pltpu


def _normalize_kernel(img_ref, scale_ref, bias_ref, out_ref):
    # img_ref:   (TR, TL) lane-dense tile of the flattened (N*C, H*W) image
    # scale_ref: (TR, 1)  per-row 1/std      (float32, broadcast over lanes)
    # bias_ref:  (TR, 1)  per-row -mean/std  (float32)
    # (img - mean) / std == img * (1/std) + (-mean/std)  -> one FMA per element.
    x = img_ref[...].astype(jnp.float32)
    out_ref[...] = (x * scale_ref[...] + bias_ref[...]).astype(out_ref.dtype)


def _round_down(x, m):
    return (x // m) * m


def _vmem_budget():
    """Return (block_bytes_target, vmem_limit_bytes) tuned per TPU generation."""
    phys_vmem = None
    try:
        phys_vmem = pltpu.get_tpu_info().vmem_capacity_bytes
    except Exception:
        try:
            kind = jax.devices()[0].device_kind.lower()
            phys_vmem = 64 * 2**20 if "v7" in kind else 128 * 2**20
        except Exception:
            phys_vmem = None
    if phys_vmem is not None and phys_vmem >= 100 * 2**20:
        # v5e / v6e: 128 MiB physical VMEM -> bigger blocks, raised scoped limit.
        return 4 * 2**20, 64 * 2**20
    # v7x (64 MiB physical VMEM) or unknown chip: stay conservative so the
    # double-buffered in+out working set stays well under the scoped limit.
    return 2 * 2**20, 32 * 2**20


def _choose_tiles(R, L, itemsize, block_bytes):
    """Pick (TR, TL) sized by total bytes; tiles need not divide R/L evenly."""
    # Lane tile: a multiple of 128 (unmasked stores) or the full lane extent.
    if L * itemsize <= block_bytes or L < 128:
        TL = L
    else:
        TL = max(128, _round_down(block_bytes // itemsize, 128))
        TL = min(TL, _round_down(L, 128))
    # Row tile: grow rows until the block hits the byte target (multiple of 8,
    # or the full row extent) instead of capping at a fixed row count.
    rows_budget = max(1, block_bytes // max(1, TL * itemsize))
    if rows_budget >= R:
        TR = R
    elif rows_budget < 8:
        TR = min(R, 8)
    else:
        TR = _round_down(rows_budget, 8)
    # Megacore (v7x): guarantee >= 2 grid steps on a parallel axis when the
    # whole image fits a single block, so the second TensorCore participates.
    if pl.cdiv(R, TR) == 1 and pl.cdiv(L, TL) == 1:
        if L >= 256:
            TL = _round_down(L // 2, 128)
        elif R >= 16:
            TR = max(8, _round_down(R // 2, 8))
        # else: input is tiny; a (1, 1) grid is fine.
    return TR, TL


def normalization_forward(img, mean, std, out_dtype=None):
    """(img - mean) / std with PyTorch-style (C,1,1) broadcasting.

    img:  (N, C, H, W)
    mean: (C,)
    std:  (C,)
    out_dtype: optional override (e.g. jnp.bfloat16 to halve write traffic when
               the consumer tolerates it). Default preserves module semantics.
    """
    N, C, H, W = img.shape
    R, L = N * C, H * W

    # Output dtype: floating inputs keep their dtype; integer images promote
    # to float32 (as torch's float mean/std would force).
    if out_dtype is None:
        out_dtype = img.dtype if jnp.issubdtype(img.dtype, jnp.floating) else jnp.float32
    itemsize = max(jnp.dtype(img.dtype).itemsize, jnp.dtype(out_dtype).itemsize)

    # Fused scale/bias, kept in float32 regardless of img dtype.
    # NOTE: std == 0 yields inf via multiplication (vs division in the reference).
    inv_std = 1.0 / std.astype(jnp.float32)
    bias = (-mean.astype(jnp.float32)) * inv_std
    scale_rows = jnp.tile(inv_std, N).reshape(R, 1)
    bias_rows = jnp.tile(bias, N).reshape(R, 1)

    # Lane-dense flattened layout: rows = N*C, lanes = H*W.
    img2 = img.reshape(R, L)

    block_bytes, vmem_limit = _vmem_budget()
    TR, TL = _choose_tiles(R, L, itemsize, block_bytes)
    grid = (pl.cdiv(R, TR), pl.cdiv(L, TL))

    out2 = pl.pallas_call(
        _normalize_kernel,
        out_shape=jax.ShapeDtypeStruct((R, L), out_dtype),
        grid_spec=pltpu.PrefetchScalarGridSpec(
            num_scalar_prefetch=0,
            grid=grid,
            in_specs=[
                pl.BlockSpec((TR, TL), lambda i, j: (i, j)),
                pl.BlockSpec((TR, 1), lambda i, j: (i, 0)),
                pl.BlockSpec((TR, 1), lambda i, j: (i, 0)),
            ],
            out_specs=pl.BlockSpec((TR, TL), lambda i, j: (i, j)),
        ),
        compiler_params=pltpu.CompilerParams(
            dimension_semantics=("parallel", "parallel"),
            vmem_limit_bytes=vmem_limit,
        ),
    )(img2, scale_rows, bias_rows)

    return out2.reshape(N, C, H, W)
    # TODO(synk): the biggest remaining win is fusing this normalize into the
    # first downstream conv/matmul kernel to remove an HBM round trip.


if __name__ == "__main__":
    key = jax.random.PRNGKey(0)

    # Small NCHW image batch: batch=2, channels=3 (RGB), spatial=16.
    N, C, H, W = 2, 3, 16, 16
    img = jax.random.uniform(key, (N, C, H, W), dtype=jnp.float32)

    # Deterministic ImageNet normalization constants (as in style_transfer.py).
    mean = jnp.array([0.485, 0.456, 0.406], dtype=jnp.float32)
    std = jnp.array([0.229, 0.224, 0.225], dtype=jnp.float32)

    out = normalization_forward(img, mean, std)
    out = jax.block_until_ready(out)

    # Reference check against plain JAX broadcasting ((img - mean) / std).
    ref = (img - mean.reshape(1, C, 1, 1)) / std.reshape(1, C, 1, 1)
    assert out.shape == (N, C, H, W)
    assert out.dtype == img.dtype
    assert jnp.allclose(out, ref, atol=1e-5, rtol=1e-5)

    print("KERNEL_OK")
</pallas_src>

<mosaic_0001>
module attributes {stable_mosaic.version = 11 : i64} {
  func.func @_normalize_kernel(%arg0: i32, %arg1: i32, %arg2: memref<6x128xf32, #tpu.memory_space<vmem>>, %arg3: memref<6x1xf32, #tpu.memory_space<vmem>>, %arg4: memref<6x1xf32, #tpu.memory_space<vmem>>, %arg5: memref<6x128xf32, #tpu.memory_space<vmem>>) attributes {dimension_semantics = [#tpu.dimension_semantics<parallel>, #tpu.dimension_semantics<parallel>], iteration_bounds = array<i64: 1, 2>, scalar_prefetch = 0 : i64, scratch_operands = 0 : i64, tpu.core_type = #tpu.core_type<tc>, window_params = [{transform_indices = @transform_0, window_bounds = array<i64: 6, 128>}, {transform_indices = @transform_1, window_bounds = array<i64: 6, 1>}, {transform_indices = @transform_2, window_bounds = array<i64: 6, 1>}, {transform_indices = @transform_3, window_bounds = array<i64: 6, 128>}]} {
    %c0 = arith.constant 0 : index
    %c0_0 = arith.constant 0 : index
    %0 = vector.load %arg2[%c0, %c0_0] : memref<6x128xf32, #tpu.memory_space<vmem>>, vector<6x128xf32>
    %c0_1 = arith.constant 0 : index
    %c0_2 = arith.constant 0 : index
    %1 = vector.load %arg3[%c0_1, %c0_2] : memref<6x1xf32, #tpu.memory_space<vmem>>, vector<6x1xf32>
    %2 = vector.broadcast %1 : vector<6x1xf32> to vector<6x128xf32>
    %3 = arith.mulf %0, %2 : vector<6x128xf32>
    %c0_3 = arith.constant 0 : index
    %c0_4 = arith.constant 0 : index
    %4 = vector.load %arg4[%c0_3, %c0_4] : memref<6x1xf32, #tpu.memory_space<vmem>>, vector<6x1xf32>
    %5 = vector.broadcast %4 : vector<6x1xf32> to vector<6x128xf32>
    %6 = arith.addf %3, %5 : vector<6x128xf32>
    %c0_5 = arith.constant 0 : index
    %c0_6 = arith.constant 0 : index
    %7 = vector.load %arg5[%c0_5, %c0_6] : memref<6x128xf32, #tpu.memory_space<vmem>>, vector<6x128xf32>
    tpu.vector_store %arg5[%c0_5, %c0_6], %6 {strides = array<i32>} : memref<6x128xf32, #tpu.memory_space<vmem>>, vector<6x128xf32>,
    return
  }
  func.func @transform_0(%arg0: i32, %arg1: i32) -> (i32, i32) {
    %c0_i32 = arith.constant 0 : i32
    return %arg0, %arg1 : i32, i32
  }
  func.func @transform_1(%arg0: i32, %arg1: i32) -> (i32, i32) {
    %c0_i32 = arith.constant 0 : i32
    %c0_i32_0 = arith.constant 0 : i32
    return %arg0, %c0_i32 : i32, i32
  }
  func.func @transform_2(%arg0: i32, %arg1: i32) -> (i32, i32) {
    %c0_i32 = arith.constant 0 : i32
    %c0_i32_0 = arith.constant 0 : i32
    return %arg0, %c0_i32 : i32, i32
  }
  func.func @transform_3(%arg0: i32, %arg1: i32) -> (i32, i32) {
    %c0_i32 = arith.constant 0 : i32
    return %arg0, %arg1 : i32, i32
  }
}

</mosaic_0001>

<llo_original>
// kernel: tpu_custom_call.1
$region0: #{tpu_custom_call.1}
  #allocation0 [shape = 'u32[]', space=smem, size = 0x4, offset = 0x4, fixed_abs, tag = 'smem constant byte address 0x4 - core index']
  #allocation1 [shape = 'u32[144,128]{1,0:T(1,128)}', space=vmem, size = 0x12000, scoped, tag = 'internal scratch']
  %s0 = inlined_call_operand.hbm [shape: f32[6,256], index: 0, kind: input, shape index: {}]
  %s1 = inlined_call_operand.hbm [shape: f32[6,1], index: 1, kind: input, shape index: {}]
  %s2 = inlined_call_operand.hbm [shape: f32[6,1], index: 2, kind: input, shape index: {}]
  %s3 = inlined_call_operand.hbm [shape: f32[6,256], index: 3, kind: output, shape index: {}]
  %s4 = sld [smem:[#allocation0]]
  $region57: #{tpu_custom_call.1} parent=0
    _
  %s6 = ssub.s32 1, %s4
  %s7 = scalar_select 0, %s6, %s4
  $region1: #{tpu_custom_call.1} parent=0
    #allocation2 [shape = 'u8[8192]{0}', space=vmem, size = 0x2000, scoped, tag = 'input window, operand 0']
    #allocation3 [shape = 's32[2]{0}', space=sflag, size = 0x8, scoped, tag = 'scoped memory for tpu_custom_call.1']
    #allocation4 [shape = 's32[2]{0}', space=sflag, size = 0x8, scoped, tag = 'scoped memory for tpu_custom_call.1']
    #allocation5 [shape = 'u8[4096]{0}', space=vmem, size = 0x1000, scoped, tag = 'input window, operand 1, single buffered']
    #allocation6 [shape = 's32[1]{0}', space=sflag, size = 0x4, scoped, tag = 'scoped memory for tpu_custom_call.1']
    #allocation7 [shape = 'u8[4096]{0}', space=vmem, size = 0x1000, scoped, tag = 'input window, operand 2, single buffered']
    #allocation8 [shape = 'u8[8192]{0}', space=vmem, size = 0x2000, scoped, tag = 'output window, operand 0']
    %8 = vsyncpa [#allocation3], 0
    %s9 = scalar_lea.sflag [#allocation3], 1
    %10 = vsyncpa %s9, 0
    %11 = vsyncpa [#allocation6], 0
    %12 = vsyncpa [#allocation4], 0
    %s13 = scalar_lea.sflag [#allocation4], 1
    %14 = vsyncpa %s13, 0
    loop: start=0, step=1, limit=4
    $region2: #{tpu_custom_call.1} parent=1 // loop_pre_header
      _
    $region3: #{tpu_custom_call.1} parent=1 // loop_header
      %s16 = sphi 0, %s20
      %p17 = scmp.ge.s32.totalorder %s16, 4
      %s23 = sphi 0, %s35
      %s24 = sphi 0, %s31
      %s25 = sphi 0, %s23
      %s26 = sphi 0, %s24
      %s27 = sphi 0, %s25
      %s28 = sphi 0, %s26
      %s40 = sphi 0, %s42
      %s43 = sphi 0, %s40
      %s44 = sphi 0, %s43
      %s60 = sphi 0, %s44
      %s66 = sphi 0, %s68
      %s69 = sphi 0, %s66
      %s70 = sphi 0, %s69
      %s86 = sphi 0, %s70
      %s92 = sphi 0, %s94
      %s95 = sphi 0, %s92
      %s96 = sphi 0, %s95
      %s112 = sphi 0, %s96
      %s120 = sphi 0, %s122
      %s123 = sphi 0, %s120
      %s124 = sphi 0, %s123
      %s140 = sphi 0, %s124
    $region4: #{tpu_custom_call.1} parent=1 // loop_header_branch
      %19 = sbr.rel (%p17) target = $region8
    $region5: #{tpu_custom_call.1} parent=1 // loop_body
      %s21 = ssub.s32 %s16, 1
      %s22 = ssub.s32 %s16, 2
      %s29 = sadd.s32 1, %s24
      %p30 = scmp.ge.s32.totalorder %s29, 2
      %s31 = scalar_select %p30, 0, %s29
      %s32 = sadd.s32 1, %s23
      %s33 = scalar_select %p30, %s32, %s23
      %p34 = scmp.ge.s32.totalorder %s33, 1
      %s35 = scalar_select %p34, 0, %s33
      %s36 = ssub.s32 %s23, %s35
      %s37 = ssub.s32 %s24, %s31
      %s38 = sor.u32 %s36, %s37
      %p39 = scmp.eq.s32.totalorder %s38, 0
      %s41 = sadd.s32 %s40, 1
      %s42 = scalar_select %p39, %s40, %s41
      %p45 = pneg %p39
      %p46 = scmp.eq.s32.totalorder %s16, 1
      %p47 = por %p45, %p46
      %p48 = scmp.ne.s32.totalorder %s40, %s43
      %p49 = scmp.eq.s32.totalorder %s16, 0
      %p50 = por %p48, %p49
      %p51 = scmp.ne.s32.totalorder %s40, %s43
      %p52 = scmp.eq.s32.totalorder %s21, 1
      %p53 = por %p51, %p52
      %p54 = scmp.ne.s32.totalorder %s43, %s44
      %p55 = scmp.eq.s32.totalorder %s21, 0
      %p56 = por %p54, %p55
      %p57 = scmp.ne.s32.totalorder %s43, %s44
      %p58 = scmp.eq.s32.totalorder %s22, 1
      %p59 = por %p57, %p58
      %p61 = scmp.ne.s32.totalorder %s44, %s60
      %p62 = scmp.eq.s32.totalorder %s22, 0
      %p63 = por %p61, %p62
      %s64 = ssub.s32 %s23, %s35
      %p65 = scmp.eq.s32.totalorder %s64, 0
      %s67 = sadd.s32 %s66, 1
      %s68 = scalar_select %p65, %s66, %s67
      %p71 = pneg %p65
      %p72 = scmp.eq.s32.totalorder %s16, 1
      %p73 = por %p71, %p72
      %p74 = scmp.ne.s32.totalorder %s66, %s69
      %p75 = scmp.eq.s32.totalorder %s16, 0
      %p76 = por %p74, %p75
      %p77 = scmp.ne.s32.totalorder %s66, %s69
      %p78 = scmp.eq.s32.totalorder %s21, 1
      %p79 = por %p77, %p78
      %p80 = scmp.ne.s32.totalorder %s69, %s70
      %p81 = scmp.eq.s32.totalorder %s21, 0
      %p82 = por %p80, %p81
      %p83 = scmp.ne.s32.totalorder %s69, %s70
      %p84 = scmp.eq.s32.totalorder %s22, 1
      %p85 = por %p83, %p84
      %p87 = scmp.ne.s32.totalorder %s70, %s86
      %p88 = scmp.eq.s32.totalorder %s22, 0
      %p89 = por %p87, %p88
      %s90 = ssub.s32 %s23, %s35
      %p91 = scmp.eq.s32.totalorder %s90, 0
      %s93 = sadd.s32 %s92, 1
      %s94 = scalar_select %p91, %s92, %s93
      %p97 = pneg %p91
      %p98 = scmp.eq.s32.totalorder %s16, 1
      %p99 = por %p97, %p98
      %p100 = scmp.ne.s32.totalorder %s92, %s95
      %p101 = scmp.eq.s32.totalorder %s16, 0
      %p102 = por %p100, %p101
      %p103 = scmp.ne.s32.totalorder %s92, %s95
      %p104 = scmp.eq.s32.totalorder %s21, 1
      %p105 = por %p103, %p104
      %p106 = scmp.ne.s32.totalorder %s95, %s96
      %p107 = scmp.eq.s32.totalorder %s21, 0
      %p108 = por %p106, %p107
      %p109 = scmp.ne.s32.totalorder %s95, %s96
      %p110 = scmp.eq.s32.totalorder %s22, 1
      %p111 = por %p109, %p110
      %p113 = scmp.ne.s32.totalorder %s96, %s112
      %p114 = scmp.eq.s32.totalorder %s22, 0
      %p115 = por %p113, %p114
      %s116 = ssub.s32 %s23, %s35
      %s117 = ssub.s32 %s24, %s31
      %s118 = sor.u32 %s116, %s117
      %p119 = scmp.eq.s32.totalorder %s118, 0
      %s121 = sadd.s32 %s120, 1
      %s122 = scalar_select %p119, %s120, %s121
      %p125 = pneg %p119
      %p126 = scmp.eq.s32.totalorder %s16, 1
      %p127 = por %p125, %p126
      %p128 = scmp.ne.s32.totalorder %s120, %s123
      %p129 = scmp.eq.s32.totalorder %s16, 0
      %p130 = por %p128, %p129
      %p131 = scmp.ne.s32.totalorder %s120, %s123
      %p132 = scmp.eq.s32.totalorder %s21, 1
      %p133 = por %p131, %p132
      %p134 = scmp.ne.s32.totalorder %s123, %s124
      %p135 = scmp.eq.s32.totalorder %s21, 0
      %p136 = por %p134, %p135
      %p137 = scmp.ne.s32.totalorder %s123, %s124
      %p138 = scmp.eq.s32.totalorder %s22, 1
      %p139 = por %p137, %p138
      %p141 = scmp.ne.s32.totalorder %s124, %s140
      %p142 = scmp.eq.s32.totalorder %s22, 0
      %p143 = por %p141, %p142
      %p144 = scmp.le.s32.totalorder 1, %s16
      %p145 = scmp.lt.s32.totalorder %s16, 3
      %p146 = pnand %p144, %p145
      %p147 = pneg %p146
      // Predicated region
      $region9: #{tpu_custom_call.1} parent=5 // pred_check
        _
      $region10: #{tpu_custom_call.1} parent=5 // pred_check_branch
        %149 = sbr.rel (%p146) target = $region12
      $region11: #{tpu_custom_call.1} parent=5 // pred_region
        %s150 = ssub.s32 %s16, 1
        // Predicated region
        $region13: #{tpu_custom_call.1} parent=11 // pred_check
          %p151 = pneg %p82
        $region14: #{tpu_custom_call.1} parent=11 // pred_check_branch
          %153 = sbr.rel (%p151) target = $region16
        $region15: #{tpu_custom_call.1} parent=11 // pred_region
          %s155 = ssub.s32 128, 128
          %156 = vsyncadd [#allocation6], %s155
          %s157 = smul.addr %s25, 128
          %s158 = scalar_lea.hbm %s1, %s157
          %s160 = sshll.u32 [#allocation5], 4
          %s161 = int_to_ptr.vmem [resolvable:$true] %s160
          %163 = dma.hbm_to_vmem [thread:$0]  %s158, 128, %s161, [#allocation6]
        $region16: #{tpu_custom_call.1} parent=11 // pred_fallthru
          _
        // Predicated region
        $region17: #{tpu_custom_call.1} parent=11 // pred_check
          %p164 = pneg %p108
        $region18: #{tpu_custom_call.1} parent=11 // pred_check_branch
          %166 = sbr.rel (%p164) target = $region20
        $region19: #{tpu_custom_call.1} parent=11 // pred_region
          %s168 = ssub.s32 128, 128
          %169 = vsyncadd [#allocation6], %s168
          %s170 = smul.addr %s25, 128
          %s171 = scalar_lea.hbm %s2, %s170
          %s173 = sshll.u32 [#allocation7], 4
          %s174 = int_to_ptr.vmem [resolvable:$true] %s173
          %176 = dma.hbm_to_vmem [thread:$0]  %s171, 128, %s174, [#allocation6]
        $region20: #{tpu_custom_call.1} parent=11 // pred_fallthru
          _
      $region12: #{tpu_custom_call.1} parent=5 // pred_fallthru
        _
      %p177 = scmp.lt.s32.totalorder %s16, 2
      // Predicated region
      $region21: #{tpu_custom_call.1} parent=5 // pred_check
        %p178 = pneg %p177
      $region22: #{tpu_custom_call.1} parent=5 // pred_check_branch
        %180 = sbr.rel (%p178) target = $region24
      $region23: #{tpu_custom_call.1} parent=5 // pred_region
        // Predicated region
        $region25: #{tpu_custom_call.1} parent=23 // pred_check
          %p181 = pneg %p50
        $region26: #{tpu_custom_call.1} parent=23 // pred_check_branch
          %183 = sbr.rel (%p181) target = $region28
        $region27: #{tpu_custom_call.1} parent=23 // pred_region
          %s184 = sand.u32 %s40, 1
          %s185 = scalar_lea.sflag [#allocation3], %s184
          %s186 = sand.u32 %s40, 1
          %s187 = smul.addr %s186, 8
          %s188 = scalar_lea.vmem [#allocation2], %s187
          %s190 = ssub.s32 128, 128
          %191 = vsyncadd %s185, %s190
          %s192 = smul.addr %s23, 2
          %s193 = sadd.s32 %s24, %s192
          %s194 = smul.addr %s193, 128
          %s195 = scalar_lea.hbm %s0, %s194
          %s197 = sshll.u32 %s188, 4
          %s198 = int_to_ptr.vmem [resolvable:$true] %s197
          %200 = dma.hbm_to_vmem [thread:$0]  %s195, 128, %s198, %s185
        $region28: #{tpu_custom_call.1} parent=23 // pred_fallthru
          _
      $region24: #{tpu_custom_call.1} parent=5 // pred_fallthru
        _
      %p201 = scmp.le.s32.totalorder 1, %s16
      %p202 = scmp.lt.s32.totalorder %s16, 3
      %p203 = pnand %p201, %p202
      %p204 = pneg %p203
      // Predicated region
      $region29: #{tpu_custom_call.1} parent=5 // pred_check
        _
      $region30: #{tpu_custom_call.1} parent=5 // pred_check_branch
        %206 = sbr.rel (%p203) target = $region32
      $region31: #{tpu_custom_call.1} parent=5 // pred_region
        %s207 = ssub.s32 %s16, 1
        %s208 = sand.u32 %s43, 1
        %s209 = scalar_lea.sflag [#allocation3], %s208
        %s210 = sand.u32 %s43, 1
        %s211 = smul.addr %s210, 8
        %s212 = scalar_lea.vmem [#allocation2], %s211
        // Predicated region
        $region33: #{tpu_custom_call.1} parent=31 // pred_check
          %p213 = pneg %p56
        $region34: #{tpu_custom_call.1} parent=31 // pred_check_branch
          %215 = sbr.rel (%p213) target = $region36
        $region35: #{tpu_custom_call.1} parent=31 // pred_region
          %216 = dma.done %s209, 128
        $region36: #{tpu_custom_call.1} parent=31 // pred_fallthru
          _
        // Predicated region
        $region37: #{tpu_custom_call.1} parent=31 // pred_check
          %p217 = pneg %p82
        $region38: #{tpu_custom_call.1} parent=31 // pred_check_branch
          %219 = sbr.rel (%p217) target = $region40
        $region39: #{tpu_custom_call.1} parent=31 // pred_region
          %220 = dma.done [#allocation6], 128
        $region40: #{tpu_custom_call.1} parent=31 // pred_fallthru
          _
        // Predicated region
        $region41: #{tpu_custom_call.1} parent=31 // pred_check
          %p221 = pneg %p108
        $region42: #{tpu_custom_call.1} parent=31 // pred_check_branch
          %223 = sbr.rel (%p221) target = $region44
        $region43: #{tpu_custom_call.1} parent=31 // pred_region
          %224 = dma.done [#allocation6], 128
        $region44: #{tpu_custom_call.1} parent=31 // pred_fallthru
          _
        %s225 = sand.u32 %s43, 1
        %s226 = scalar_lea.sflag [#allocation3], %s225
        %s227 = sand.u32 %s43, 1
        %s228 = smul.addr %s227, 8
        %s229 = scalar_lea.vmem [#allocation2], %s228
        %p230 = pneg %p56
        %p231 = pneg %p53
        %p232 = pneg %p82
        %p233 = pneg %p79
        %p234 = pneg %p108
        %p235 = pneg %p105
        %p236 = pneg %p136
        %p237 = pneg %p133
        %s238 = sand.u32 %s123, 1
        %s239 = scalar_lea.sflag [#allocation4], %s238
        %s240 = sand.u32 %s123, 1
        %s241 = smul.addr %s240, 8
        %s242 = scalar_lea.vmem [#allocation8], %s241
        %v243 = vld [vmem:[%s212] sm:$0x3f]
        %v244 = vld [vmem:[#allocation5] sm:$0x3f]
        %246 = vset.pattern.permute.xlu0 0
        %247 = vperm.xlu0 %246, %v244
        %v248 = vpop.permute.xlu0 %247
        %v250 = vmul.f32 %v243, %v248
        %v251 = vld [vmem:[#allocation7] sm:$0x3f]
        %253 = vset.pattern.permute.xlu0 0
        %254 = vperm.xlu0 %253, %v251
        %v255 = vpop.permute.xlu0 %254
        %v257 = vadd.f32 %v250, %v255
        %258 = vst [vmem:[%s242] sm:$0x3f] %v257
        %s259 = sand.u32 %s123, 1
        %s260 = scalar_lea.sflag [#allocation4], %s259
        %s261 = sand.u32 %s123, 1
        %s262 = smul.addr %s261, 8
        %s263 = scalar_lea.vmem [#allocation8], %s262
        // Predicated region
        $region45: #{tpu_custom_call.1} parent=31 // pred_check
          %p264 = pneg %p133
        $region46: #{tpu_custom_call.1} parent=31 // pred_check_branch
          %266 = sbr.rel (%p264) target = $region48
        $region47: #{tpu_custom_call.1} parent=31 // pred_region
          %s268 = ssub.s32 128, 128
          %269 = vsyncadd %s260, %s268
          %s270 = smul.addr %s25, 2
          %s271 = sadd.s32 %s26, %s270
          %s272 = smul.addr %s271, 128
          %s273 = scalar_lea.hbm %s3, %s272
          %s275 = sshll.u32 %s263, 4
          %s276 = int_to_ptr.vmem [resolvable:$true] %s275
          %278 = dma.vmem_to_hbm [thread:$0]  %s276, 128, %s273, %s260
        $region48: #{tpu_custom_call.1} parent=31 // pred_fallthru
          _
      $region32: #{tpu_custom_call.1} parent=5 // pred_fallthru
        _
      %p279 = scmp.le.s32.totalorder 2, %s16
      // Predicated region
      $region49: #{tpu_custom_call.1} parent=5 // pred_check
        %p280 = pneg %p279
      $region50: #{tpu_custom_call.1} parent=5 // pred_check_branch
        %282 = sbr.rel (%p280) target = $region52
      $region51: #{tpu_custom_call.1} parent=5 // pred_region
        %s283 = ssub.s32 %s16, 2
        // Predicated region
        $region53: #{tpu_custom_call.1} parent=51 // pred_check
          %p284 = pneg %p139
        $region54: #{tpu_custom_call.1} parent=51 // pred_check_branch
          %286 = sbr.rel (%p284) target = $region56
        $region55: #{tpu_custom_call.1} parent=51 // pred_region
          %s287 = sand.u32 %s124, 1
          %s288 = scalar_lea.sflag [#allocation4], %s287
          %s289 = sand.u32 %s124, 1
          %s290 = smul.addr %s289, 8
          %s291 = scalar_lea.vmem [#allocation8], %s290
          %292 = dma.done %s288, 128
        $region56: #{tpu_custom_call.1} parent=51 // pred_fallthru
          _
      $region52: #{tpu_custom_call.1} parent=5 // pred_fallthru
        _
    $region6: #{tpu_custom_call.1} parent=1 // loop_footer
      %s20 = sadd.s32 1, %s16
    $region7: #{tpu_custom_call.1} parent=1 // loop_footer_branch
      %15 = sbr.rel target = $region3
    $region8: #{tpu_custom_call.1} parent=1 // loop_exit
      _
    %293 = vsyncpa [#allocation3], 1
    %s294 = scalar_lea.sflag [#allocation3], 1
    %295 = vsyncpa %s294, 1
    %296 = vsyncpa [#allocation6], 1
    %297 = vsyncpa [#allocation4], 1
    %s298 = scalar_lea.sflag [#allocation4], 1
    %299 = vsyncpa %s298, 1

</llo_original>
